<compile_context>
chip_gen: v7x
topology: tpu7x:2x2x1
jax: 0.10.0
libtpu: 0.0.40
codegen_flags: <defaults>
</compile_context>

<pallas_src>
import math

import jax
import jax.numpy as jnp
from jax import lax
from jax.experimental import pallas as pl
from jax.experimental.pallas import tpu as pltpu


# ----------------------------- Pallas kernel -----------------------------

def _resblock_kernel(x_ref, smat_ref, rhs1_ref, rhs2_ref,
                     s1_ref, t1_ref, s2_ref, t2_ref, rb_ref, o_ref):
    # x_ref / o_ref : (B*H, W*C) f32, lane-dense, images stacked along rows
    # smat_ref      : (2*B*H, B*H) 0/1 row-shift operator [S_down; S_up]
    # rhs*_ref      : (3*W*C, W*C) K-stacked band matrices [M0; M1; M2]
    # s*/t*/rb_ref  : (1, W*C) f32 per-channel vectors tiled across W
    BH, WC = x_ref.shape
    cdt = rhs1_ref.dtype

    x = x_ref[...]
    smat = smat_ref[...]

    def nac(h, rhs_ref, scale, shift_vec):
        # folded BatchNorm + ReLU (f32 on the VPU), cast once to matmul dtype
        a = jnp.maximum(h * scale + shift_vec, 0.0).astype(cdt)
        # Row-shifted copies with per-image halo zeroing baked into the exact
        # 0/1 shift operator (one small MXU matmul; no misaligned sublane
        # slices, no padded scratch, no roll).
        pn = jnp.dot(smat, a, preferred_element_type=jnp.float32)
        a_prev = pn[0:BH, :].astype(cdt)        # a[r-1], 0 at each image's top row
        a_next = pn[BH:2 * BH, :].astype(cdt)   # a[r+1], 0 at each image's bottom row
        # 3x3 SAME conv == one lane-dense K-concatenated MXU matmul (K = 3*W*C),
        # f32 accumulation inside the MXU.
        lhs = jnp.concatenate([a_prev, a, a_next], axis=1)
        return jnp.dot(lhs, rhs_ref[...], preferred_element_type=jnp.float32)

    h1 = nac(x, rhs1_ref, s1_ref[...], t1_ref[...])   # NAC 1 (conv1 bias folded into t2)
    h2 = nac(h1, rhs2_ref, s2_ref[...], t2_ref[...])  # NAC 2
    o_ref[...] = x + h2 + rb_ref[...]                 # residual + conv2 bias, one pass


def resblock_forward(x_nchw, kparams):
    """x_nchw: (B, C, H, W) float32.  kparams from prepare_kernel_params."""
    rhs1, rhs2, s1, t1, s2, t2, rb = kparams
    B, C, H, W = x_nchw.shape
    WC = W * C
    BH = B * H
    mdt = rhs1.dtype

    # NCHW -> NHWC -> one batch-stacked lane-dense (B*H, W*C) slab; col = w*C + c.
    x = jnp.transpose(x_nchw, (0, 2, 3, 1)).reshape(BH, WC).astype(jnp.float32)

    # Exact 0/1 row-shift operator [S_down; S_up]:
    #   (S_down @ a)[r] = a[r-1] inside an image, 0 at each image's top row
    #   (S_up   @ a)[r] = a[r+1] inside an image, 0 at each image's bottom row
    # This bakes both the +/-1 vertical conv shift and the per-image halo
    # zeroing of the batch-stacked slab into a tiny, fully aligned MXU operand.
    r = jnp.arange(BH)
    s_down = ((r[:, None] - 1 == r[None, :]) & (r[:, None] % H != 0))
    s_up = ((r[:, None] + 1 == r[None, :]) & (r[:, None] % H != H - 1))
    smat = jnp.concatenate([s_down, s_up], axis=0).astype(mdt)      # (2*BH, BH)

    # Single grid step: every operand (< 0.5 MiB total) is resident in VMEM,
    # no per-step pipeline overhead, no double-buffering of grid-invariant
    # weights, and matmul M = B*H rows per MXU weight load.
    out = pl.pallas_call(
        _resblock_kernel,
        out_shape=jax.ShapeDtypeStruct((BH, WC), jnp.float32),
    )(x, smat, rhs1, rhs2, s1, t1, s2, t2, rb)

    return jnp.transpose(out.reshape(B, H, W, C), (0, 3, 1, 2))     # back to NCHW


# -------------------- parameter setup (plain JAX glue) --------------------

def _spectral_normalize(w_hwio, key, n_iter=30, eps=1e-12):
    """torch.nn.utils.spectral_norm semantics: divide the (Cout, Cin*kh*kw)
    matrix by its top singular value (power iteration)."""
    cout = w_hwio.shape[-1]
    wm = jnp.transpose(w_hwio, (3, 2, 0, 1)).reshape(cout, -1)
    u = jax.random.normal(key, (cout,), jnp.float32)
    u = u / (jnp.linalg.norm(u) + eps)
    v = jnp.zeros((wm.shape[1],), jnp.float32)
    for _ in range(n_iter):
        v = wm.T @ u
        v = v / (jnp.linalg.norm(v) + eps)
        u = wm @ v
        u = u / (jnp.linalg.norm(u) + eps)
    sigma = u @ (wm @ v)
    return w_hwio / sigma


def _fold_bn(gamma, beta, mean, var, eps=1e-5):
    scale = gamma / jnp.sqrt(var + eps)
    shift = beta - mean * scale
    return scale, shift                      # (C,), (C,)


def init_params(key, C, use_weight_norm=True):
    keys = jax.random.split(key, 16)
    bound = 1.0 / math.sqrt(C * 9)           # PyTorch Conv2d default init bound

    def conv_params(kw, kb, ksn):
        w = jax.random.uniform(kw, (3, 3, C, C), jnp.float32, -bound, bound)  # HWIO
        if use_weight_norm:
            w = _spectral_normalize(w, ksn)
        b = jax.random.uniform(kb, (C,), jnp.float32, -bound, bound)
        return w, b

    def bn_params(kg, kb, km, kv):
        gamma = 1.0 + 0.1 * jax.random.normal(kg, (C,), jnp.float32)
        beta = 0.1 * jax.random.normal(kb, (C,), jnp.float32)
        mean = 0.1 * jax.random.normal(km, (C,), jnp.float32)
        var = 1.0 + 0.1 * jax.random.uniform(kv, (C,), jnp.float32)
        return _fold_bn(gamma, beta, mean, var)

    w1, b1 = conv_params(keys[0], keys[1], keys[2])
    s1, t1 = bn_params(keys[3], keys[4], keys[5], keys[6])
    w2, b2 = conv_params(keys[7], keys[8], keys[9])
    s2, t2 = bn_params(keys[10], keys[11], keys[12], keys[13])
    return (w1, b1, s1, t1, w2, b2, s2, t2)


def prepare_kernel_params(params, W, matmul_dtype=jnp.bfloat16):
    """One-time re-layout of the module parameters for the kernel.

    Builds, per conv, the K-stacked block-banded matrix [M0; M1; M2] with
        M_dy[wp*C+ci, w*C+co] = W[dy, wp-w+1, ci, co]   (zero outside |wp-w|<=1)
    so the 3x3 SAME conv becomes a single (B*H, 3*W*C) @ (3*W*C, W*C) matmul.
    Also tiles the per-channel BN/bias vectors across W and folds conv1's bias
    into the BN2 shift.

    # TODO(synk): for W*C >> 128 the dense band matrices are O((W*C)^2) with
    # only 3/W density -- tile the W axis into 128-lane blocks (or use im2col)
    # before scaling this block up, especially on v7x's 64 MiB VMEM.
    """
    w1, b1, s1, t1, w2, b2, s2, t2 = params
    C = w1.shape[2]
    WC = W * C

    def band(w_hwio):
        mats = []
        for dy in range(3):
            m = jnp.zeros((WC, WC), jnp.float32)
            for dx in range(3):
                m = m + jnp.kron(jnp.eye(W, k=1 - dx, dtype=jnp.float32),
                                 w_hwio[dy, dx])
            mats.append(m)
        return jnp.concatenate(mats, axis=0).astype(matmul_dtype)   # (3*WC, WC)

    def tile(v):                                       # (C,) -> (1, W*C), col = w*C + c
        return jnp.tile(v.astype(jnp.float32), (W,)).reshape(1, WC)

    t2_folded = s2 * b1 + t2                           # fold conv1 bias into BN2 shift
    return (band(w1), band(w2),
            tile(s1), tile(t1),
            tile(s2), tile(t2_folded),
            tile(b2))                                  # conv2 bias, added with residual


# ---------------- pure-JAX reference (for validation) ----------------

def ref_forward(x_nchw, params):
    w1, b1, s1, t1, w2, b2, s2, t2 = params
    x = jnp.transpose(x_nchw, (0, 2, 3, 1)).astype(jnp.float32)

    def nac(h, w, b, s, t):
        h = jnp.maximum(h * s + t, 0.0)
        y = lax.conv_general_dilated(
            h, w, window_strides=(1, 1), padding="SAME",
            dimension_numbers=("NHWC", "HWIO", "NHWC"),
            precision=lax.Precision.HIGHEST)
        return y + b

    h = nac(x, w1, b1, s1, t1)
    h = nac(h, w2, b2, s2, t2)
    return jnp.transpose(x + h, (0, 3, 1, 2))


if __name__ == "__main__":
    key = jax.random.PRNGKey(0)
    k_x, k_p = jax.random.split(key)

    # NCHW, matching the PyTorch module; W*C = 128 -> fully lane-dense slabs.
    B, C, H, W = 2, 8, 16, 16
    x = jax.random.normal(k_x, (B, C, H, W), jnp.float32)
    params = init_params(k_p, C, use_weight_norm=True)
    ref = ref_forward(x, params)

    # f32-matmul path: tight semantics / indexing check against the reference.
    kp_f32 = prepare_kernel_params(params, W, matmul_dtype=jnp.float32)
    out_f32 = jax.block_until_ready(resblock_forward(x, kp_f32))
    assert out_f32.shape == x.shape
    err_f32 = float(jnp.max(jnp.abs(out_f32 - ref)))
    assert err_f32 < 1e-3, f"f32 path max abs err {err_f32}"

    # bf16-matmul path: the single production path on v5e/v6e/v7x (bf16 MXU
    # operands, f32 accumulation).  Activations are rounded to bf16 before the
    # conv matmuls, hence the looser tolerance.
    kp_bf16 = prepare_kernel_params(params, W, matmul_dtype=jnp.bfloat16)
    out_bf16 = jax.block_until_ready(resblock_forward(x, kp_bf16))
    err_bf16 = float(jnp.max(jnp.abs(out_bf16 - ref)))
    assert err_bf16 < 5e-2, f"bf16 path max abs err {err_bf16}"

    print("KERNEL_OK")
</pallas_src>

<mosaic_0001>
module attributes {stable_mosaic.version = 11 : i64} {
  func.func @_resblock_kernel(%arg0: memref<32x128xf32, #tpu.memory_space<vmem>>, %arg1: memref<64x32xf32, #tpu.memory_space<vmem>>, %arg2: memref<384x128xf32, #tpu.memory_space<vmem>>, %arg3: memref<384x128xf32, #tpu.memory_space<vmem>>, %arg4: memref<1x128xf32, #tpu.memory_space<vmem>>, %arg5: memref<1x128xf32, #tpu.memory_space<vmem>>, %arg6: memref<1x128xf32, #tpu.memory_space<vmem>>, %arg7: memref<1x128xf32, #tpu.memory_space<vmem>>, %arg8: memref<1x128xf32, #tpu.memory_space<vmem>>, %arg9: memref<32x128xf32, #tpu.memory_space<vmem>>) attributes {dimension_semantics = [], scalar_prefetch = 0 : i64, scratch_operands = 0 : i64, tpu.core_type = #tpu.core_type<tc>} {
    %c0 = arith.constant 0 : index
    %c0_0 = arith.constant 0 : index
    %0 = vector.load %arg0[%c0, %c0_0] : memref<32x128xf32, #tpu.memory_space<vmem>>, vector<32x128xf32>
    %c0_1 = arith.constant 0 : index
    %c0_2 = arith.constant 0 : index
    %1 = vector.load %arg1[%c0_1, %c0_2] : memref<64x32xf32, #tpu.memory_space<vmem>>, vector<64x32xf32>
    %c0_3 = arith.constant 0 : index
    %c0_4 = arith.constant 0 : index
    %2 = vector.load %arg4[%c0_3, %c0_4] : memref<1x128xf32, #tpu.memory_space<vmem>>, vector<1x128xf32>
    %c0_5 = arith.constant 0 : index
    %c0_6 = arith.constant 0 : index
    %3 = vector.load %arg5[%c0_5, %c0_6] : memref<1x128xf32, #tpu.memory_space<vmem>>, vector<1x128xf32>
    %4 = vector.broadcast %2 : vector<1x128xf32> to vector<32x128xf32>
    %5 = arith.mulf %0, %4 : vector<32x128xf32>
    %6 = vector.broadcast %3 : vector<1x128xf32> to vector<32x128xf32>
    %7 = arith.addf %5, %6 : vector<32x128xf32>
    %cst = arith.constant 0.000000e+00 : f32
    %8 = vector.broadcast %cst : f32 to vector<32x128xf32>
    %9 = arith.maximumf %7, %8 : vector<32x128xf32>
    %cst_7 = arith.constant dense<0.000000e+00> : vector<64x128xf32>
    %10 = tpu.matmul %1, %9, %cst_7 {dimension_numbers = #tpu.dot_dimension_numbers<[1], [0], [0], [1], [0, 0, 1, 1], [], []>} : vector<64x32xf32>, vector<32x128xf32>, vector<64x128xf32> -> vector<64x128xf32>
    %11 = vector.extract_strided_slice %10 {offsets = [0, 0], sizes = [32, 128], strides = [1, 1]} : vector<64x128xf32> to vector<32x128xf32>
    %12 = vector.extract_strided_slice %10 {offsets = [32, 0], sizes = [32, 128], strides = [1, 1]} : vector<64x128xf32> to vector<32x128xf32>
    %13 = tpu.concatenate %11, %9, %12 in 1 : vector<32x128xf32>, vector<32x128xf32>, vector<32x128xf32> -> vector<32x384xf32>
    %c0_8 = arith.constant 0 : index
    %c0_9 = arith.constant 0 : index
    %14 = vector.load %arg2[%c0_8, %c0_9] : memref<384x128xf32, #tpu.memory_space<vmem>>, vector<384x128xf32>
    %cst_10 = arith.constant dense<0.000000e+00> : vector<32x128xf32>
    %15 = tpu.matmul %13, %14, %cst_10 {dimension_numbers = #tpu.dot_dimension_numbers<[1], [0], [0], [1], [0, 0, 1, 1], [], []>} : vector<32x384xf32>, vector<384x128xf32>, vector<32x128xf32> -> vector<32x128xf32>
    %c0_11 = arith.constant 0 : index
    %c0_12 = arith.constant 0 : index
    %16 = vector.load %arg6[%c0_11, %c0_12] : memref<1x128xf32, #tpu.memory_space<vmem>>, vector<1x128xf32>
    %c0_13 = arith.constant 0 : index
    %c0_14 = arith.constant 0 : index
    %17 = vector.load %arg7[%c0_13, %c0_14] : memref<1x128xf32, #tpu.memory_space<vmem>>, vector<1x128xf32>
    %18 = vector.broadcast %16 : vector<1x128xf32> to vector<32x128xf32>
    %19 = arith.mulf %15, %18 : vector<32x128xf32>
    %20 = vector.broadcast %17 : vector<1x128xf32> to vector<32x128xf32>
    %21 = arith.addf %19, %20 : vector<32x128xf32>
    %cst_15 = arith.constant 0.000000e+00 : f32
    %22 = vector.broadcast %cst_15 : f32 to vector<32x128xf32>
    %23 = arith.maximumf %21, %22 : vector<32x128xf32>
    %cst_16 = arith.constant dense<0.000000e+00> : vector<64x128xf32>
    %24 = tpu.matmul %1, %23, %cst_16 {dimension_numbers = #tpu.dot_dimension_numbers<[1], [0], [0], [1], [0, 0, 1, 1], [], []>} : vector<64x32xf32>, vector<32x128xf32>, vector<64x128xf32> -> vector<64x128xf32>
    %25 = vector.extract_strided_slice %24 {offsets = [0, 0], sizes = [32, 128], strides = [1, 1]} : vector<64x128xf32> to vector<32x128xf32>
    %26 = vector.extract_strided_slice %24 {offsets = [32, 0], sizes = [32, 128], strides = [1, 1]} : vector<64x128xf32> to vector<32x128xf32>
    %27 = tpu.concatenate %25, %23, %26 in 1 : vector<32x128xf32>, vector<32x128xf32>, vector<32x128xf32> -> vector<32x384xf32>
    %c0_17 = arith.constant 0 : index
    %c0_18 = arith.constant 0 : index
    %28 = vector.load %arg3[%c0_17, %c0_18] : memref<384x128xf32, #tpu.memory_space<vmem>>, vector<384x128xf32>
    %cst_19 = arith.constant dense<0.000000e+00> : vector<32x128xf32>
    %29 = tpu.matmul %27, %28, %cst_19 {dimension_numbers = #tpu.dot_dimension_numbers<[1], [0], [0], [1], [0, 0, 1, 1], [], []>} : vector<32x384xf32>, vector<384x128xf32>, vector<32x128xf32> -> vector<32x128xf32>
    %30 = arith.addf %0, %29 : vector<32x128xf32>
    %c0_20 = arith.constant 0 : index
    %c0_21 = arith.constant 0 : index
    %31 = vector.load %arg8[%c0_20, %c0_21] : memref<1x128xf32, #tpu.memory_space<vmem>>, vector<1x128xf32>
    %32 = vector.broadcast %31 : vector<1x128xf32> to vector<32x128xf32>
    %33 = arith.addf %30, %32 : vector<32x128xf32>
    %c0_22 = arith.constant 0 : index
    %c0_23 = arith.constant 0 : index
    %34 = vector.load %arg9[%c0_22, %c0_23] : memref<32x128xf32, #tpu.memory_space<vmem>>, vector<32x128xf32>
    tpu.vector_store %arg9[%c0_22, %c0_23], %33 {strides = array<i32>} : memref<32x128xf32, #tpu.memory_space<vmem>>, vector<32x128xf32>,
    return
  }
}

</mosaic_0001>

<llo_original>
// kernel: tpu_custom_call.1
$region0: #{tpu_custom_call.1}
  #allocation0 [shape = 'u32[]', space=smem, size = 0x4, offset = 0x4, fixed_abs, tag = 'smem constant byte address 0x4 - core index']
  #allocation1 [shape = 'u32[144,128]{1,0:T(1,128)}', space=vmem, size = 0x12000, scoped, tag = 'internal scratch']
  %s0 = inlined_call_operand.vmem [shape: f32[32,128], index: 0, kind: input, shape index: {}]
  %s1 = inlined_call_operand.vmem [shape: f32[64,32], index: 1, kind: input, shape index: {}]
  %s2 = inlined_call_operand.hbm [shape: f32[384,128], index: 2, kind: input, shape index: {}]
  %s3 = inlined_call_operand.hbm [shape: f32[384,128], index: 3, kind: input, shape index: {}]
  %s4 = inlined_call_operand.vmem [shape: f32[1,128], index: 4, kind: input, shape index: {}]
  %s5 = inlined_call_operand.vmem [shape: f32[1,128], index: 5, kind: input, shape index: {}]
  %s6 = inlined_call_operand.vmem [shape: f32[1,128], index: 6, kind: input, shape index: {}]
  %s7 = inlined_call_operand.vmem [shape: f32[1,128], index: 7, kind: input, shape index: {}]
  %s8 = inlined_call_operand.vmem [shape: f32[1,128], index: 8, kind: input, shape index: {}]
  %s9 = inlined_call_operand.hbm [shape: f32[32,128], index: 9, kind: output, shape index: {}]
  %s10 = sld [smem:[#allocation0]]
  $region54: #{tpu_custom_call.1} parent=0
    _
  %s12 = ssub.s32 1, %s10
  %s13 = scalar_select 0, %s12, %s10
  $region1: #{tpu_custom_call.1} parent=0
    #allocation2 [shape = 'u8[196608]{0}', space=vmem, size = 0x30000, scoped, tag = 'input window, operand 2, single buffered']
    #allocation3 [shape = 's32[1]{0}', space=sflag, size = 0x4, scoped, tag = 'scoped memory for tpu_custom_call.1']
    #allocation4 [shape = 's32[1]{0}', space=sflag, size = 0x4, scoped, tag = 'scoped memory for tpu_custom_call.1']
    #allocation5 [shape = 'u8[196608]{0}', space=vmem, size = 0x30000, scoped, tag = 'input window, operand 3, single buffered']
    #allocation6 [shape = 's32[1]{0}', space=sflag, size = 0x4, scoped, tag = 'scoped memory for tpu_custom_call.1']
    #allocation7 [shape = 'u8[16384]{0}', space=vmem, size = 0x4000, scoped, tag = 'output window, operand 0, single buffered']
    %14 = vsyncpa [#allocation3], 0
    %15 = vsyncpa [#allocation6], 0
    %16 = vsyncpa [#allocation4], 0
    // Predicated region
    $region2: #{tpu_custom_call.1} parent=1 // pred_check
      _
    $region3: #{tpu_custom_call.1} parent=1 // pred_check_branch
      %18 = sbr.rel (0) target = $region5
    $region4: #{tpu_custom_call.1} parent=1 // pred_region
      _
    $region5: #{tpu_custom_call.1} parent=1 // pred_fallthru
      _
    // Predicated region
    $region6: #{tpu_custom_call.1} parent=1 // pred_check
      _
    $region7: #{tpu_custom_call.1} parent=1 // pred_check_branch
      %20 = sbr.rel (0) target = $region9
    $region8: #{tpu_custom_call.1} parent=1 // pred_region
      _
    $region9: #{tpu_custom_call.1} parent=1 // pred_fallthru
      _
    // Predicated region
    $region10: #{tpu_custom_call.1} parent=1 // pred_check
      _
    $region11: #{tpu_custom_call.1} parent=1 // pred_check_branch
      %22 = sbr.rel (0) target = $region13
    $region12: #{tpu_custom_call.1} parent=1 // pred_region
      %s24 = ssub.s32 6144, 6144
      %25 = vsyncadd [#allocation3], %s24
      %s26 = sshll.u32 [#allocation2], 4
      %s27 = int_to_ptr.vmem [resolvable:$true] %s26
      %32 = dma.hbm_to_vmem [thread:$0]  %s2, 6144, %s27, [#allocation3], 128, 128, 8
    $region13: #{tpu_custom_call.1} parent=1 // pred_fallthru
      _
    // Predicated region
    $region14: #{tpu_custom_call.1} parent=1 // pred_check
      _
    $region15: #{tpu_custom_call.1} parent=1 // pred_check_branch
      %34 = sbr.rel (0) target = $region17
    $region16: #{tpu_custom_call.1} parent=1 // pred_region
      %s36 = ssub.s32 6144, 6144
      %37 = vsyncadd [#allocation6], %s36
      %s38 = sshll.u32 [#allocation5], 4
      %s39 = int_to_ptr.vmem [resolvable:$true] %s38
      %44 = dma.hbm_to_vmem [thread:$0]  %s3, 6144, %s39, [#allocation6], 128, 128, 8
    $region17: #{tpu_custom_call.1} parent=1 // pred_fallthru
      _
    // Predicated region
    $region18: #{tpu_custom_call.1} parent=1 // pred_check
      _
    $region19: #{tpu_custom_call.1} parent=1 // pred_check_branch
      %46 = sbr.rel (0) target = $region21
    $region20: #{tpu_custom_call.1} parent=1 // pred_region
      _
    $region21: #{tpu_custom_call.1} parent=1 // pred_fallthru
      _
    // Predicated region
    $region22: #{tpu_custom_call.1} parent=1 // pred_check
      _
    $region23: #{tpu_custom_call.1} parent=1 // pred_check_branch
      %48 = sbr.rel (0) target = $region25
    $region24: #{tpu_custom_call.1} parent=1 // pred_region
      _
    $region25: #{tpu_custom_call.1} parent=1 // pred_fallthru
      _
    // Predicated region
    $region26: #{tpu_custom_call.1} parent=1 // pred_check
      _
    $region27: #{tpu_custom_call.1} parent=1 // pred_check_branch
      %50 = sbr.rel (0) target = $region29
    $region28: #{tpu_custom_call.1} parent=1 // pred_region
      _
    $region29: #{tpu_custom_call.1} parent=1 // pred_fallthru
      _
    // Predicated region
    $region30: #{tpu_custom_call.1} parent=1 // pred_check
      _
    $region31: #{tpu_custom_call.1} parent=1 // pred_check_branch
      %52 = sbr.rel (0) target = $region33
    $region32: #{tpu_custom_call.1} parent=1 // pred_region
      _
    $region33: #{tpu_custom_call.1} parent=1 // pred_fallthru
      _
    // Predicated region
    $region34: #{tpu_custom_call.1} parent=1 // pred_check
      _
    $region35: #{tpu_custom_call.1} parent=1 // pred_check_branch
      %54 = sbr.rel (0) target = $region37
    $region36: #{tpu_custom_call.1} parent=1 // pred_region
      _
    $region37: #{tpu_custom_call.1} parent=1 // pred_fallthru
      _
    // Predicated region
    $region38: #{tpu_custom_call.1} parent=1 // pred_check
      _
    $region39: #{tpu_custom_call.1} parent=1 // pred_check_branch
      %56 = sbr.rel (0) target = $region41
    $region40: #{tpu_custom_call.1} parent=1 // pred_region
      %57 = dma.done [#allocation3], 6144
    $region41: #{tpu_custom_call.1} parent=1 // pred_fallthru
      _
    // Predicated region
    $region42: #{tpu_custom_call.1} parent=1 // pred_check
      _
    $region43: #{tpu_custom_call.1} parent=1 // pred_check_branch
      %59 = sbr.rel (0) target = $region45
    $region44: #{tpu_custom_call.1} parent=1 // pred_region
      %60 = dma.done [#allocation6], 6144
    $region45: #{tpu_custom_call.1} parent=1 // pred_fallthru
      _
    %v61 = vld [vmem:[%s0] sm:$0xff]
    %v62 = vld [vmem:[%s0 + $0x8] sm:$0xff]
    %v63 = vld [vmem:[%s0 + $0x10] sm:$0xff]
    %v64 = vld [vmem:[%s0 + $0x18] sm:$0xff]
    %v65 = vld [vmem:[%s1] sm:$0xff]
    %v66 = vld [vmem:[%s1 + $0x8] sm:$0xff]
    %v67 = vld [vmem:[%s1 + $0x10] sm:$0xff]
    %v68 = vld [vmem:[%s1 + $0x18] sm:$0xff]
    %v69 = vld [vmem:[%s1 + $0x20] sm:$0xff]
    %v70 = vld [vmem:[%s1 + $0x28] sm:$0xff]
    %v71 = vld [vmem:[%s1 + $0x30] sm:$0xff]
    %v72 = vld [vmem:[%s1 + $0x38] sm:$0xff]
    %v73 = vld [vmem:[%s4] sm:$0x1]
    %v74 = vld [vmem:[%s5] sm:$0x1]
    %v76 = vlaneseq
    %v77 = vshrl.u32 %v76, 7
    %v78 = vsub.s32 0, %v77
    %v79 = vrot.slane %v73, %v78
    %v81 = vmul.f32 %v61, %v79
    %v82 = vmul.f32 %v62, %v79
    %v83 = vmul.f32 %v63, %v79
    %v84 = vmul.f32 %v64, %v79
    %v86 = vlaneseq
    %v87 = vshrl.u32 %v86, 7
    %v88 = vsub.s32 0, %v87
    %v89 = vrot.slane %v74, %v88
    %v91 = vadd.f32 %v81, %v89
    %v92 = vadd.f32 %v82, %v89
    %v93 = vadd.f32 %v83, %v89
    %v94 = vadd.f32 %v84, %v89
    %v95 = vmax.f32 %v91, 0.0
    %v96 = vmax.f32 %v92, 0.0
    %v97 = vmax.f32 %v93, 0.0
    %v98 = vmax.f32 %v94, 0.0
    %vm99 = vcmask 261120
    %v101 = vsel %vm99, %v65, 0
    %v104 = vsel %vm99, %v66, 0
    %v107 = vsel %vm99, %v67, 0
    %v110 = vsel %vm99, %v68, 0
    %v113 = vsel %vm99, %v69, 0
    %v116 = vsel %vm99, %v70, 0
    %v119 = vsel %vm99, %v71, 0
    %v122 = vsel %vm99, %v72, 0
    %124 = vmatprep.subr.mxu0 0.0
    %125 = vmatpush1.msra.mxu0 %v95
    %126 = vmatprep.subr.mxu0 0.0
    %127 = vmatpush1.msra.mxu0 %v96
    %128 = vmatprep.subr.mxu0 0.0
    %129 = vmatpush1.msra.mxu0 %v97
    %130 = vmatprep.subr.mxu0 0.0
    %131 = vmatpush1.msra.mxu0 %v98
    %132 = vmatprep.subr.mxu0 0.0
    %133 = vmatpush1.msra.mxu0 0.0
    %134 = vmatprep.subr.mxu0 0.0
    %135 = vmatpush1.msra.mxu0 0.0
    %136 = vmatprep.subr.mxu0 0.0
    %137 = vmatpush1.msra.mxu0 0.0
    %138 = vmatprep.subr.mxu0 0.0
    %139 = vmatpush1.msra.mxu0 0.0
    %140 = vmatprep.subr.mxu0 0.0
    %141 = vmatpush1.msra.mxu0 0.0
    %142 = vmatprep.subr.mxu0 0.0
    %143 = vmatpush1.msra.mxu0 0.0
    %144 = vmatprep.subr.mxu0 0.0
    %145 = vmatpush1.msra.mxu0 0.0
    %146 = vmatprep.subr.mxu0 0.0
    %147 = vmatpush1.msra.mxu0 0.0
    %148 = vmatprep.subr.mxu0 0.0
    %149 = vmatpush1.msra.mxu0 0.0
    %150 = vmatprep.subr.mxu0 0.0
    %151 = vmatpush1.msra.mxu0 0.0
    %152 = vmatprep.subr.mxu0 0.0
    %153 = vmatpush1.msra.mxu0 0.0
    %154 = vmatprep.subr.mxu0 0.0
    %155 = vmatpush1.msra.mxu0 0.0
    %156 = vmatprep.subr.mxu0 0.0
    %157 = vmatpush1.msra.mxu0 0.0
    %158 = vmatprep.subr.mxu0 0.0
    %159 = vmatpush1.msra.mxu0 0.0
    %160 = vmatprep.subr.mxu0 0.0
    %161 = vmatpush1.msra.mxu0 0.0
    %162 = vmatprep.subr.mxu0 0.0
    %163 = vmatpush1.msra.mxu0 0.0
    %164 = vmatprep.subr.mxu0 0.0
    %165 = vmatpush1.msra.mxu0 0.0
    %166 = vmatprep.subr.mxu0 0.0
    %167 = vmatpush1.msra.mxu0 0.0
    %168 = vmatprep.subr.mxu0 0.0
    %169 = vmatpush1.msra.mxu0 0.0
    %170 = vmatprep.subr.mxu0 0.0
    %171 = vmatpush1.msra.mxu0 0.0
    %172 = vmatprep.subr.mxu0 0.0
    %173 = vmatpush1.msra.mxu0 0.0
    %174 = vmatprep.subr.mxu0 0.0
    %175 = vmatpush1.msra.mxu0 0.0
    %176 = vmatprep.subr.mxu0 0.0
    %177 = vmatpush1.msra.mxu0 0.0
    %178 = vmatprep.subr.mxu0 0.0
    %179 = vmatpush1.msra.mxu0 0.0
    %180 = vmatprep.subr.mxu0 0.0
    %181 = vmatpush1.msra.mxu0 0.0
    %182 = vmatprep.subr.mxu0 0.0
    %183 = vmatpush1.msra.mxu0 0.0
    %184 = vmatprep.subr.mxu0 0.0
    %185 = vmatpush1.msra.mxu0 0.0
    %186 = vmatprep.subr.mxu0 0.0
    %187 = vmatpush1.msra.mxu0 0.0
    %188 = vmatprep.mubr.f32.mxu0 0.0
    %189 = vmatmul.mubr.f32.gmra.mrb[0].mxu0 %v101
    %v190 = vpop.f32.mrb[0].mxu0
    %v191 = vadd.f32 0.0, %v190
    %v192 = vpop.f32.mrb[0].mxu0
    %193 = vmatprep.mubr.f32.mxu0 0.0
    %194 = vmatmul.mubr.f32.gmra.mrb[0].mxu0 %v104
    %v195 = vpop.f32.mrb[0].mxu0
    %v196 = vadd.f32 0.0, %v195
    %v197 = vpop.f32.mrb[0].mxu0
    %198 = vmatprep.mubr.f32.mxu0 0.0
    %199 = vmatmul.mubr.f32.gmra.mrb[0].mxu0 %v107
    %v200 = vpop.f32.mrb[0].mxu0
    %v201 = vadd.f32 0.0, %v200
    %v202 = vpop.f32.mrb[0].mxu0
    %203 = vmatprep.mubr.f32.mxu0 0.0
    %204 = vmatmul.mubr.f32.gmra.mrb[0].mxu0 %v110
    %v205 = vpop.f32.mrb[0].mxu0
    %v206 = vadd.f32 0.0, %v205
    %v207 = vpop.f32.mrb[0].mxu0
    %208 = vmatprep.mubr.f32.mxu0 0.0
    %209 = vmatmul.mubr.f32.gmra.mrb[0].mxu0 %v113
    %v210 = vpop.f32.mrb[0].mxu0
    %v211 = vadd.f32 0.0, %v210
    %v212 = vpop.f32.mrb[0].mxu0
    %213 = vmatprep.mubr.f32.mxu0 0.0
    %214 = vmatmul.mubr.f32.gmra.mrb[0].mxu0 %v116
    %v215 = vpop.f32.mrb[0].mxu0
    %v216 = vadd.f32 0.0, %v215
    %v217 = vpop.f32.mrb[0].mxu0
    %218 = vmatprep.mubr.f32.mxu0 0.0
    %219 = vmatmul.mubr.f32.gmra.mrb[0].mxu0 %v119
    %v220 = vpop.f32.mrb[0].mxu0
    %v221 = vadd.f32 0.0, %v220
    %v222 = vpop.f32.mrb[0].mxu0
    %223 = vmatprep.mubr.f32.mxu0 0.0
    %224 = vmatmul.mubr.f32.gmra.mrb[0].mxu0 %v122
    %v225 = vpop.f32.mrb[0].mxu0
    %v226 = vadd.f32 0.0, %v225
    %v227 = vpop.f32.mrb[0].mxu0
    %228 = vdwg.mxu0
    %v229 = vld [vmem:[#allocation2] sm:$0xff]
    %v230 = vld [vmem:[#allocation2 + $0x8] sm:$0xff]
    %v231 = vld [vmem:[#allocation2 + $0x10] sm:$0xff]
    %v232 = vld [vmem:[#allocation2 + $0x18] sm:$0xff]
    %v233 = vld [vmem:[#allocation2 + $0x20] sm:$0xff]
    %v234 = vld [vmem:[#allocation2 + $0x28] sm:$0xff]
    %v235 = vld [vmem:[#allocation2 + $0x30] sm:$0xff]
    %v236 = vld [vmem:[#allocation2 + $0x38] sm:$0xff]
    %v237 = vld [vmem:[#allocation2 + $0x40] sm:$0xff]
    %v238 = vld [vmem:[#allocation2 + $0x48] sm:$0xff]
    %v239 = vld [vmem:[#allocation2 + $0x50] sm:$0xff]
    %v240 = vld [vmem:[#allocation2 + $0x58] sm:$0xff]
    %v241 = vld [vmem:[#allocation2 + $0x60] sm:$0xff]
    %v242 = vld [vmem:[#allocation2 + $0x68] sm:$0xff]
    %v243 = vld [vmem:[#allocation2 + $0x70] sm:$0xff]
    %v244 = vld [vmem:[#allocation2 + $0x78] sm:$0xff]
    %v245 = vld [vmem:[#allocation2 + $0x80] sm:$0xff]
    %v246 = vld [vmem:[#allocation2 + $0x88] sm:$0xff]
    %v247 = vld [vmem:[#allocation2 + $0x90] sm:$0xff]
    %v248 = vld [vmem:[#allocation2 + $0x98] sm:$0xff]
    %v249 = vld [vmem:[#allocation2 + $0xa0] sm:$0xff]
    %v250 = vld [vmem:[#allocation2 + $0xa8] sm:$0xff]
    %v251 = vld [vmem:[#allocation2 + $0xb0] sm:$0xff]
    %v252 = vld [vmem:[#allocation2 + $0xb8] sm:$0xff]
    %v253 = vld [vmem:[#allocation2 + $0xc0] sm:$0xff]
    %v254 = vld [vmem:[#allocation2 + $0xc8] sm:$0xff]
    %v255 = vld [vmem:[#allocation2 + $0xd0] sm:$0xff]
    %v256 = vld [vmem:[#allocation2 + $0xd8] sm:$0xff]
    %v257 = vld [vmem:[#allocation2 + $0xe0] sm:$0xff]
    %v258 = vld [vmem:[#allocation2 + $0xe8] sm:$0xff]
    %v259 = vld [vmem:[#allocation2 + $0xf0] sm:$0xff]
    %v260 = vld [vmem:[#allocation2 + $0xf8] sm:$0xff]
    %v261 = vld [vmem:[#allocation2 + $0x100] sm:$0xff]
    %v262 = vld [vmem:[#allocation2 + $0x108] sm:$0xff]
    %v263 = vld [vmem:[#allocation2 + $0x110] sm:$0xff]
    %v264 = vld [vmem:[#allocation2 + $0x118] sm:$0xff]
    %v265 = vld [vmem:[#allocation2 + $0x120] sm:$0xff]
    %v266 = vld [vmem:[#allocation2 + $0x128] sm:$0xff]
    %v267 = vld [vmem:[#allocation2 + $0x130] sm:$0xff]
    %v268 = vld [vmem:[#allocation2 + $0x138] sm:$0xff]
    %v269 = vld [vmem:[#allocation2 + $0x140] sm:$0xff]
    %v270 = vld [vmem:[#allocation2 + $0x148] sm:$0xff]
    %v271 = vld [vmem:[#allocation2 + $0x150] sm:$0xff]
    %v272 = vld [vmem:[#allocation2 + $0x158] sm:$0xff]
    %v273 = vld [vmem:[#allocation2 + $0x160] sm:$0xff]
    %v274 = vld [vmem:[#allocation2 + $0x168] sm:$0xff]
    %v275 = vld [vmem:[#allocation2 + $0x170] sm:$0xff]
    %v276 = vld [vmem:[#allocation2 + $0x178] sm:$0xff]
    %277 = vmatprep.subr.mxu0 0.0
    %278 = vmatpush1.msra.mxu0 %v229
    %279 = vmatprep.subr.mxu0 0.0
    %280 = vmatpush1.msra.mxu0 %v230
    %281 = vmatprep.subr.mxu0 0.0
    %282 = vmatpush1.msra.mxu0 %v231
    %283 = vmatprep.subr.mxu0 0.0
    %284 = vmatpush1.msra.mxu0 %v232
    %285 = vmatprep.subr.mxu0 0.0
    %286 = vmatpush1.msra.mxu0 %v233
    %287 = vmatprep.subr.mxu0 0.0
    %288 = vmatpush1.msra.mxu0 %v234
    %289 = vmatprep.subr.mxu0 0.0
    %290 = vmatpush1.msra.mxu0 %v235
    %291 = vmatprep.subr.mxu0 0.0
    %292 = vmatpush1.msra.mxu0 %v236
    %293 = vmatprep.subr.mxu0 0.0
    %294 = vmatpush1.msra.mxu0 %v237
    %295 = vmatprep.subr.mxu0 0.0
    %296 = vmatpush1.msra.mxu0 %v238
    %297 = vmatprep.subr.mxu0 0.0
    %298 = vmatpush1.msra.mxu0 %v239
    %299 = vmatprep.subr.mxu0 0.0
    %300 = vmatpush1.msra.mxu0 %v240
    %301 = vmatprep.subr.mxu0 0.0
    %302 = vmatpush1.msra.mxu0 %v241
    %303 = vmatprep.subr.mxu0 0.0
    %304 = vmatpush1.msra.mxu0 %v242
    %305 = vmatprep.subr.mxu0 0.0
    %306 = vmatpush1.msra.mxu0 %v243
    %307 = vmatprep.subr.mxu0 0.0
    %308 = vmatpush1.msra.mxu0 %v244
    %309 = vmatprep.subr.mxu0 0.0
    %310 = vmatpush1.msra.mxu0 %v245
    %311 = vmatprep.subr.mxu0 0.0
    %312 = vmatpush1.msra.mxu0 %v246
    %313 = vmatprep.subr.mxu0 0.0
    %314 = vmatpush1.msra.mxu0 %v247
    %315 = vmatprep.subr.mxu0 0.0
    %316 = vmatpush1.msra.mxu0 %v248
    %317 = vmatprep.subr.mxu0 0.0
    %318 = vmatpush1.msra.mxu0 %v249
    %319 = vmatprep.subr.mxu0 0.0
    %320 = vmatpush1.msra.mxu0 %v250
    %321 = vmatprep.subr.mxu0 0.0
    %322 = vmatpush1.msra.mxu0 %v251
    %323 = vmatprep.subr.mxu0 0.0
    %324 = vmatpush1.msra.mxu0 %v252
    %325 = vmatprep.subr.mxu0 0.0
    %326 = vmatpush1.msra.mxu0 %v253
    %327 = vmatprep.subr.mxu0 0.0
    %328 = vmatpush1.msra.mxu0 %v254
    %329 = vmatprep.subr.mxu0 0.0
    %330 = vmatpush1.msra.mxu0 %v255
    %331 = vmatprep.subr.mxu0 0.0
    %332 = vmatpush1.msra.mxu0 %v256
    %333 = vmatprep.subr.mxu0 0.0
    %334 = vmatpush1.msra.mxu0 %v257
    %335 = vmatprep.subr.mxu0 0.0
    %336 = vmatpush1.msra.mxu0 %v258
    %337 = vmatprep.subr.mxu0 0.0
    %338 = vmatpush1.msra.mxu0 %v259
    %339 = vmatprep.subr.mxu0 0.0
    %340 = vmatpush1.msra.mxu0 %v260
    %341 = vmatprep.mubr.f32.mxu0 %v95
    %342 = vmatmul.mubr.f32.gmra.mrb[0].mxu0 %v191
    %v343 = vpop.f32.mrb[0].mxu0
    %v344 = vadd.f32 0.0, %v343
    %v345 = vpop.f32.mrb[0].mxu0
    %346 = vmatprep.mubr.f32.mxu0 %v96
    %347 = vmatmul.mubr.f32.gmra.mrb[0].mxu0 %v196
    %v348 = vpop.f32.mrb[0].mxu0
    %v349 = vadd.f32 0.0, %v348
    %v350 = vpop.f32.mrb[0].mxu0
    %351 = vmatprep.mubr.f32.mxu0 %v97
    %352 = vmatmul.mubr.f32.gmra.mrb[0].mxu0 %v201
    %v353 = vpop.f32.mrb[0].mxu0
    %v354 = vadd.f32 0.0, %v353
    %v355 = vpop.f32.mrb[0].mxu0
    %356 = vmatprep.mubr.f32.mxu0 %v98
    %357 = vmatmul.mubr.f32.gmra.mrb[0].mxu0 %v206
    %v358 = vpop.f32.mrb[0].mxu0
    %v359 = vadd.f32 0.0, %v358
    %v360 = vpop.f32.mrb[0].mxu0
    %361 = vdwg.mxu0
    %362 = vmatprep.subr.mxu0 0.0
    %363 = vmatpush1.msra.mxu0 %v261
    %364 = vmatprep.subr.mxu0 0.0
    %365 = vmatpush1.msra.mxu0 %v262
    %366 = vmatprep.subr.mxu0 0.0
    %367 = vmatpush1.msra.mxu0 %v263
    %368 = vmatprep.subr.mxu0 0.0
    %369 = vmatpush1.msra.mxu0 %v264
    %370 = vmatprep.subr.mxu0 0.0
    %371 = vmatpush1.msra.mxu0 %v265
    %372 = vmatprep.subr.mxu0 0.0
    %373 = vmatpush1.msra.mxu0 %v266
    %374 = vmatprep.subr.mxu0 0.0
    %375 = vmatpush1.msra.mxu0 %v267
    %376 = vmatprep.subr.mxu0 0.0
    %377 = vmatpush1.msra.mxu0 %v268
    %378 = vmatprep.subr.mxu0 0.0
    %379 = vmatpush1.msra.mxu0 %v269
    %380 = vmatprep.subr.mxu0 0.0
    %381 = vmatpush1.msra.mxu0 %v270
    %382 = vmatprep.subr.mxu0 0.0
    %383 = vmatpush1.msra.mxu0 %v271
    %384 = vmatprep.subr.mxu0 0.0
    %385 = vmatpush1.msra.mxu0 %v272
    %386 = vmatprep.subr.mxu0 0.0
    %387 = vmatpush1.msra.mxu0 %v273
    %388 = vmatprep.subr.mxu0 0.0
    %389 = vmatpush1.msra.mxu0 %v274
    %390 = vmatprep.subr.mxu0 0.0
    %391 = vmatpush1.msra.mxu0 %v275
    %392 = vmatprep.subr.mxu0 0.0
    %393 = vmatpush1.msra.mxu0 %v276
    %394 = vmatprep.subr.mxu0 0.0
    %395 = vmatpush1.msra.mxu0 0.0
    %396 = vmatprep.subr.mxu0 0.0
    %397 = vmatpush1.msra.mxu0 0.0
    %398 = vmatprep.subr.mxu0 0.0
    %399 = vmatpush1.msra.mxu0 0.0
    %400 = vmatprep.subr.mxu0 0.0
    %401 = vmatpush1.msra.mxu0 0.0
    %402 = vmatprep.subr.mxu0 0.0
    %403 = vmatpush1.msra.mxu0 0.0
    %404 = vmatprep.subr.mxu0 0.0
    %405 = vmatpush1.msra.mxu0 0.0
    %406 = vmatprep.subr.mxu0 0.0
    %407 = vmatpush1.msra.mxu0 0.0
    %408 = vmatprep.subr.mxu0 0.0
    %409 = vmatpush1.msra.mxu0 0.0
    %410 = vmatprep.subr.mxu0 0.0
    %411 = vmatpush1.msra.mxu0 0.0
    %412 = vmatprep.subr.mxu0 0.0
    %413 = vmatpush1.msra.mxu0 0.0
    %414 = vmatprep.subr.mxu0 0.0
    %415 = vmatpush1.msra.mxu0 0.0
    %416 = vmatprep.subr.mxu0 0.0
    %417 = vmatpush1.msra.mxu0 0.0
    %418 = vmatprep.subr.mxu0 0.0
    %419 = vmatpush1.msra.mxu0 0.0
    %420 = vmatprep.subr.mxu0 0.0
    %421 = vmatpush1.msra.mxu0 0.0
    %422 = vmatprep.subr.mxu0 0.0
    %423 = vmatpush1.msra.mxu0 0.0
    %424 = vmatprep.subr.mxu0 0.0
    %425 = vmatpush1.msra.mxu0 0.0
    %426 = vmatprep.mubr.f32.mxu0 0.0
    %427 = vmatmul.mubr.f32.gmra.mrb[0].mxu0 %v211
    %v428 = vpop.f32.mrb[0].mxu0
    %v429 = vadd.f32 %v344, %v428
    %v430 = vpop.f32.mrb[0].mxu0
    %431 = vmatprep.mubr.f32.mxu0 0.0
    %432 = vmatmul.mubr.f32.gmra.mrb[0].mxu0 %v216
    %v433 = vpop.f32.mrb[0].mxu0
    %v434 = vadd.f32 %v349, %v433
    %v435 = vpop.f32.mrb[0].mxu0
    %436 = vmatprep.mubr.f32.mxu0 0.0
    %437 = vmatmul.mubr.f32.gmra.mrb[0].mxu0 %v221
    %v438 = vpop.f32.mrb[0].mxu0
    %v439 = vadd.f32 %v354, %v438
    %v440 = vpop.f32.mrb[0].mxu0
    %441 = vmatprep.mubr.f32.mxu0 0.0
    %442 = vmatmul.mubr.f32.gmra.mrb[0].mxu0 %v226
    %v443 = vpop.f32.mrb[0].mxu0
    %v444 = vadd.f32 %v359, %v443
    %v445 = vpop.f32.mrb[0].mxu0
    %446 = vdwg.mxu0
    %v447 = vld [vmem:[%s6] sm:$0x1]
    %v448 = vld [vmem:[%s7] sm:$0x1]
    %v450 = vlaneseq
    %v451 = vshrl.u32 %v450, 7
    %v452 = vsub.s32 0, %v451
    %v453 = vrot.slane %v447, %v452
    %v455 = vmul.f32 %v429, %v453
    %v456 = vmul.f32 %v434, %v453
    %v457 = vmul.f32 %v439, %v453
    %v458 = vmul.f32 %v444, %v453
    %v460 = vlaneseq
    %v461 = vshrl.u32 %v460, 7
    %v462 = vsub.s32 0, %v461
    %v463 = vrot.slane %v448, %v462
    %v465 = vadd.f32 %v455, %v463
    %v466 = vadd.f32 %v456, %v463
    %v467 = vadd.f32 %v457, %v463
    %v468 = vadd.f32 %v458, %v463
    %v469 = vmax.f32 %v465, 0.0
    %v470 = vmax.f32 %v466, 0.0
    %v471 = vmax.f32 %v467, 0.0
    %v472 = vmax.f32 %v468, 0.0
    %473 = vmatprep.subr.mxu0 0.0
    %474 = vmatpush1.msra.mxu0 %v469
    %475 = vmatprep.subr.mxu0 0.0
    %476 = vmatpush1.msra.mxu0 %v470
    %477 = vmatprep.subr.mxu0 0.0
    %478 = vmatpush1.msra.mxu0 %v471
    %479 = vmatprep.subr.mxu0 0.0
    %480 = vmatpush1.msra.mxu0 %v472
    %481 = vmatprep.subr.mxu0 0.0
    %482 = vmatpush1.msra.mxu0 0.0
    %483 = vmatprep.subr.mxu0 0.0
    %484 = vmatpush1.msra.mxu0 0.0
    %485 = vmatprep.subr.mxu0 0.0
    %486 = vmatpush1.msra.mxu0 0.0
    %487 = vmatprep.subr.mxu0 0.0
    %488 = vmatpush1.msra.mxu0 0.0
    %489 = vmatprep.subr.mxu0 0.0
    %490 = vmatpush1.msra.mxu0 0.0
    %491 = vmatprep.subr.mxu0 0.0
    %492 = vmatpush1.msra.mxu0 0.0
    %493 = vmatprep.subr.mxu0 0.0
    %494 = vmatpush1.msra.mxu0 0.0
    %495 = vmatprep.subr.mxu0 0.0
    %496 = vmatpush1.msra.mxu0 0.0
    %497 = vmatprep.subr.mxu0 0.0
    %498 = vmatpush1.msra.mxu0 0.0
    %499 = vmatprep.subr.mxu0 0.0
    %500 = vmatpush1.msra.mxu0 0.0
    %501 = vmatprep.subr.mxu0 0.0
    %502 = vmatpush1.msra.mxu0 0.0
    %503 = vmatprep.subr.mxu0 0.0
    %504 = vmatpush1.msra.mxu0 0.0
    %505 = vmatprep.subr.mxu0 0.0
    %506 = vmatpush1.msra.mxu0 0.0
    %507 = vmatprep.subr.mxu0 0.0
    %508 = vmatpush1.msra.mxu0 0.0
    %509 = vmatprep.subr.mxu0 0.0
    %510 = vmatpush1.msra.mxu0 0.0
    %511 = vmatprep.subr.mxu0 0.0
    %512 = vmatpush1.msra.mxu0 0.0
    %513 = vmatprep.subr.mxu0 0.0
    %514 = vmatpush1.msra.mxu0 0.0
    %515 = vmatprep.subr.mxu0 0.0
    %516 = vmatpush1.msra.mxu0 0.0
    %517 = vmatprep.subr.mxu0 0.0
    %518 = vmatpush1.msra.mxu0 0.0
    %519 = vmatprep.subr.mxu0 0.0
    %520 = vmatpush1.msra.mxu0 0.0
    %521 = vmatprep.subr.mxu0 0.0
    %522 = vmatpush1.msra.mxu0 0.0
    %523 = vmatprep.subr.mxu0 0.0
    %524 = vmatpush1.msra.mxu0 0.0
    %525 = vmatprep.subr.mxu0 0.0
    %526 = vmatpush1.msra.mxu0 0.0
    %527 = vmatprep.subr.mxu0 0.0
    %528 = vmatpush1.msra.mxu0 0.0
    %529 = vmatprep.subr.mxu0 0.0
    %530 = vmatpush1.msra.mxu0 0.0
    %531 = vmatprep.subr.mxu0 0.0
    %532 = vmatpush1.msra.mxu0 0.0
    %533 = vmatprep.subr.mxu0 0.0
    %534 = vmatpush1.msra.mxu0 0.0
    %535 = vmatprep.subr.mxu0 0.0
    %536 = vmatpush1.msra.mxu0 0.0
    %537 = vmatprep.mubr.f32.mxu0 0.0
    %538 = vmatmul.mubr.f32.gmra.mrb[0].mxu0 %v101
    %v539 = vpop.f32.mrb[0].mxu0
    %v540 = vadd.f32 0.0, %v539
    %v541 = vpop.f32.mrb[0].mxu0
    %542 = vmatprep.mubr.f32.mxu0 0.0
    %543 = vmatmul.mubr.f32.gmra.mrb[0].mxu0 %v104
    %v544 = vpop.f32.mrb[0].mxu0
    %v545 = vadd.f32 0.0, %v544
    %v546 = vpop.f32.mrb[0].mxu0
    %547 = vmatprep.mubr.f32.mxu0 0.0
    %548 = vmatmul.mubr.f32.gmra.mrb[0].mxu0 %v107
    %v549 = vpop.f32.mrb[0].mxu0
    %v550 = vadd.f32 0.0, %v549
    %v551 = vpop.f32.mrb[0].mxu0
    %552 = vmatprep.mubr.f32.mxu0 0.0
    %553 = vmatmul.mubr.f32.gmra.mrb[0].mxu0 %v110
    %v554 = vpop.f32.mrb[0].mxu0
    %v555 = vadd.f32 0.0, %v554
    %v556 = vpop.f32.mrb[0].mxu0
    %557 = vmatprep.mubr.f32.mxu0 0.0
    %558 = vmatmul.mubr.f32.gmra.mrb[0].mxu0 %v113
    %v559 = vpop.f32.mrb[0].mxu0
    %v560 = vadd.f32 0.0, %v559
    %v561 = vpop.f32.mrb[0].mxu0
    %562 = vmatprep.mubr.f32.mxu0 0.0
    %563 = vmatmul.mubr.f32.gmra.mrb[0].mxu0 %v116
    %v564 = vpop.f32.mrb[0].mxu0
    %v565 = vadd.f32 0.0, %v564
    %v566 = vpop.f32.mrb[0].mxu0
    %567 = vmatprep.mubr.f32.mxu0 0.0
    %568 = vmatmul.mubr.f32.gmra.mrb[0].mxu0 %v119
    %v569 = vpop.f32.mrb[0].mxu0
    %v570 = vadd.f32 0.0, %v569
    %v571 = vpop.f32.mrb[0].mxu0
    %572 = vmatprep.mubr.f32.mxu0 0.0
    %573 = vmatmul.mubr.f32.gmra.mrb[0].mxu0 %v122
    %v574 = vpop.f32.mrb[0].mxu0
    %v575 = vadd.f32 0.0, %v574
    %v576 = vpop.f32.mrb[0].mxu0
    %577 = vdwg.mxu0
    %v578 = vld [vmem:[#allocation5] sm:$0xff]
    %v579 = vld [vmem:[#allocation5 + $0x8] sm:$0xff]
    %v580 = vld [vmem:[#allocation5 + $0x10] sm:$0xff]
    %v581 = vld [vmem:[#allocation5 + $0x18] sm:$0xff]
    %v582 = vld [vmem:[#allocation5 + $0x20] sm:$0xff]
    %v583 = vld [vmem:[#allocation5 + $0x28] sm:$0xff]
    %v584 = vld [vmem:[#allocation5 + $0x30] sm:$0xff]
    %v585 = vld [vmem:[#allocation5 + $0x38] sm:$0xff]
    %v586 = vld [vmem:[#allocation5 + $0x40] sm:$0xff]
    %v587 = vld [vmem:[#allocation5 + $0x48] sm:$0xff]
    %v588 = vld [vmem:[#allocation5 + $0x50] sm:$0xff]
    %v589 = vld [vmem:[#allocation5 + $0x58] sm:$0xff]
    %v590 = vld [vmem:[#allocation5 + $0x60] sm:$0xff]
    %v591 = vld [vmem:[#allocation5 + $0x68] sm:$0xff]
    %v592 = vld [vmem:[#allocation5 + $0x70] sm:$0xff]
    %v593 = vld [vmem:[#allocation5 + $0x78] sm:$0xff]
    %v594 = vld [vmem:[#allocation5 + $0x80] sm:$0xff]
    %v595 = vld [vmem:[#allocation5 + $0x88] sm:$0xff]
    %v596 = vld [vmem:[#allocation5 + $0x90] sm:$0xff]
    %v597 = vld [vmem:[#allocation5 + $0x98] sm:$0xff]
    %v598 = vld [vmem:[#allocation5 + $0xa0] sm:$0xff]
    %v599 = vld [vmem:[#allocation5 + $0xa8] sm:$0xff]
    %v600 = vld [vmem:[#allocation5 + $0xb0] sm:$0xff]
    %v601 = vld [vmem:[#allocation5 + $0xb8] sm:$0xff]
    %v602 = vld [vmem:[#allocation5 + $0xc0] sm:$0xff]
    %v603 = vld [vmem:[#allocation5 + $0xc8] sm:$0xff]
    %v604 = vld [vmem:[#allocation5 + $0xd0] sm:$0xff]
    %v605 = vld [vmem:[#allocation5 + $0xd8] sm:$0xff]
    %v606 = vld [vmem:[#allocation5 + $0xe0] sm:$0xff]
    %v607 = vld [vmem:[#allocation5 + $0xe8] sm:$0xff]
    %v608 = vld [vmem:[#allocation5 + $0xf0] sm:$0xff]
    %v609 = vld [vmem:[#allocation5 + $0xf8] sm:$0xff]
    %v610 = vld [vmem:[#allocation5 + $0x100] sm:$0xff]
    %v611 = vld [vmem:[#allocation5 + $0x108] sm:$0xff]
    %v612 = vld [vmem:[#allocation5 + $0x110] sm:$0xff]
    %v613 = vld [vmem:[#allocation5 + $0x118] sm:$0xff]
    %v614 = vld [vmem:[#allocation5 + $0x120] sm:$0xff]
    %v615 = vld [vmem:[#allocation5 + $0x128] sm:$0xff]
    %v616 = vld [vmem:[#allocation5 + $0x130] sm:$0xff]
    %v617 = vld [vmem:[#allocation5 + $0x138] sm:$0xff]
    %v618 = vld [vmem:[#allocation5 + $0x140] sm:$0xff]
    %v619 = vld [vmem:[#allocation5 + $0x148] sm:$0xff]
    %v620 = vld [vmem:[#allocation5 + $0x150] sm:$0xff]
    %v621 = vld [vmem:[#allocation5 + $0x158] sm:$0xff]
    %v622 = vld [vmem:[#allocation5 + $0x160] sm:$0xff]
    %v623 = vld [vmem:[#allocation5 + $0x168] sm:$0xff]
    %v624 = vld [vmem:[#allocation5 + $0x170] sm:$0xff]
    %v625 = vld [vmem:[#allocation5 + $0x178] sm:$0xff]
    %626 = vmatprep.subr.mxu0 0.0
    %627 = vmatpush1.msra.mxu0 %v578
    %628 = vmatprep.subr.mxu0 0.0
    %629 = vmatpush1.msra.mxu0 %v579
    %630 = vmatprep.subr.mxu0 0.0
    %631 = vmatpush1.msra.mxu0 %v580
    %632 = vmatprep.subr.mxu0 0.0
    %633 = vmatpush1.msra.mxu0 %v581
    %634 = vmatprep.subr.mxu0 0.0
    %635 = vmatpush1.msra.mxu0 %v582
    %636 = vmatprep.subr.mxu0 0.0
    %637 = vmatpush1.msra.mxu0 %v583
    %638 = vmatprep.subr.mxu0 0.0
    %639 = vmatpush1.msra.mxu0 %v584
    %640 = vmatprep.subr.mxu0 0.0
    %641 = vmatpush1.msra.mxu0 %v585
    %642 = vmatprep.subr.mxu0 0.0
    %643 = vmatpush1.msra.mxu0 %v586
    %644 = vmatprep.subr.mxu0 0.0
    %645 = vmatpush1.msra.mxu0 %v587
    %646 = vmatprep.subr.mxu0 0.0
    %647 = vmatpush1.msra.mxu0 %v588
    %648 = vmatprep.subr.mxu0 0.0
    %649 = vmatpush1.msra.mxu0 %v589
    %650 = vmatprep.subr.mxu0 0.0
    %651 = vmatpush1.msra.mxu0 %v590
    %652 = vmatprep.subr.mxu0 0.0
    %653 = vmatpush1.msra.mxu0 %v591
    %654 = vmatprep.subr.mxu0 0.0
    %655 = vmatpush1.msra.mxu0 %v592
    %656 = vmatprep.subr.mxu0 0.0
    %657 = vmatpush1.msra.mxu0 %v593
    %658 = vmatprep.subr.mxu0 0.0
    %659 = vmatpush1.msra.mxu0 %v594
    %660 = vmatprep.subr.mxu0 0.0
    %661 = vmatpush1.msra.mxu0 %v595
    %662 = vmatprep.subr.mxu0 0.0
    %663 = vmatpush1.msra.mxu0 %v596
    %664 = vmatprep.subr.mxu0 0.0
    %665 = vmatpush1.msra.mxu0 %v597
    %666 = vmatprep.subr.mxu0 0.0
    %667 = vmatpush1.msra.mxu0 %v598
    %668 = vmatprep.subr.mxu0 0.0
    %669 = vmatpush1.msra.mxu0 %v599
    %670 = vmatprep.subr.mxu0 0.0
    %671 = vmatpush1.msra.mxu0 %v600
    %672 = vmatprep.subr.mxu0 0.0
    %673 = vmatpush1.msra.mxu0 %v601
    %674 = vmatprep.subr.mxu0 0.0
    %675 = vmatpush1.msra.mxu0 %v602
    %676 = vmatprep.subr.mxu0 0.0
    %677 = vmatpush1.msra.mxu0 %v603
    %678 = vmatprep.subr.mxu0 0.0
    %679 = vmatpush1.msra.mxu0 %v604
    %680 = vmatprep.subr.mxu0 0.0
    %681 = vmatpush1.msra.mxu0 %v605
    %682 = vmatprep.subr.mxu0 0.0
    %683 = vmatpush1.msra.mxu0 %v606
    %684 = vmatprep.subr.mxu0 0.0
    %685 = vmatpush1.msra.mxu0 %v607
    %686 = vmatprep.subr.mxu0 0.0
    %687 = vmatpush1.msra.mxu0 %v608
    %688 = vmatprep.subr.mxu0 0.0
    %689 = vmatpush1.msra.mxu0 %v609
    %690 = vmatprep.mubr.f32.mxu0 %v469
    %691 = vmatmul.mubr.f32.gmra.mrb[0].mxu0 %v540
    %v692 = vpop.f32.mrb[0].mxu0
    %v693 = vadd.f32 0.0, %v692
    %v694 = vpop.f32.mrb[0].mxu0
    %695 = vmatprep.mubr.f32.mxu0 %v470
    %696 = vmatmul.mubr.f32.gmra.mrb[0].mxu0 %v545
    %v697 = vpop.f32.mrb[0].mxu0
    %v698 = vadd.f32 0.0, %v697
    %v699 = vpop.f32.mrb[0].mxu0
    %700 = vmatprep.mubr.f32.mxu0 %v471
    %701 = vmatmul.mubr.f32.gmra.mrb[0].mxu0 %v550
    %v702 = vpop.f32.mrb[0].mxu0
    %v703 = vadd.f32 0.0, %v702
    %v704 = vpop.f32.mrb[0].mxu0
    %705 = vmatprep.mubr.f32.mxu0 %v472
    %706 = vmatmul.mubr.f32.gmra.mrb[0].mxu0 %v555
    %v707 = vpop.f32.mrb[0].mxu0
    %v708 = vadd.f32 0.0, %v707
    %v709 = vpop.f32.mrb[0].mxu0
    %710 = vdwg.mxu0
    %711 = vmatprep.subr.mxu0 0.0
    %712 = vmatpush1.msra.mxu0 %v610
    %713 = vmatprep.subr.mxu0 0.0
    %714 = vmatpush1.msra.mxu0 %v611
    %715 = vmatprep.subr.mxu0 0.0
    %716 = vmatpush1.msra.mxu0 %v612
    %717 = vmatprep.subr.mxu0 0.0
    %718 = vmatpush1.msra.mxu0 %v613
    %719 = vmatprep.subr.mxu0 0.0
    %720 = vmatpush1.msra.mxu0 %v614
    %721 = vmatprep.subr.mxu0 0.0
    %722 = vmatpush1.msra.mxu0 %v615
    %723 = vmatprep.subr.mxu0 0.0
    %724 = vmatpush1.msra.mxu0 %v616
    %725 = vmatprep.subr.mxu0 0.0
    %726 = vmatpush1.msra.mxu0 %v617
    %727 = vmatprep.subr.mxu0 0.0
    %728 = vmatpush1.msra.mxu0 %v618
    %729 = vmatprep.subr.mxu0 0.0
    %730 = vmatpush1.msra.mxu0 %v619
    %731 = vmatprep.subr.mxu0 0.0
    %732 = vmatpush1.msra.mxu0 %v620
    %733 = vmatprep.subr.mxu0 0.0
    %734 = vmatpush1.msra.mxu0 %v621
    %735 = vmatprep.subr.mxu0 0.0
    %736 = vmatpush1.msra.mxu0 %v622
    %737 = vmatprep.subr.mxu0 0.0
    %738 = vmatpush1.msra.mxu0 %v623
    %739 = vmatprep.subr.mxu0 0.0
    %740 = vmatpush1.msra.mxu0 %v624
    %741 = vmatprep.subr.mxu0 0.0
    %742 = vmatpush1.msra.mxu0 %v625
    %743 = vmatprep.subr.mxu0 0.0
    %744 = vmatpush1.msra.mxu0 0.0
    %745 = vmatprep.subr.mxu0 0.0
    %746 = vmatpush1.msra.mxu0 0.0
    %747 = vmatprep.subr.mxu0 0.0
    %748 = vmatpush1.msra.mxu0 0.0
    %749 = vmatprep.subr.mxu0 0.0
    %750 = vmatpush1.msra.mxu0 0.0
    %751 = vmatprep.subr.mxu0 0.0
    %752 = vmatpush1.msra.mxu0 0.0
    %753 = vmatprep.subr.mxu0 0.0
    %754 = vmatpush1.msra.mxu0 0.0
    %755 = vmatprep.subr.mxu0 0.0
    %756 = vmatpush1.msra.mxu0 0.0
    %757 = vmatprep.subr.mxu0 0.0
    %758 = vmatpush1.msra.mxu0 0.0
    %759 = vmatprep.subr.mxu0 0.0
    %760 = vmatpush1.msra.mxu0 0.0
    %761 = vmatprep.subr.mxu0 0.0
    %762 = vmatpush1.msra.mxu0 0.0
    %763 = vmatprep.subr.mxu0 0.0
    %764 = vmatpush1.msra.mxu0 0.0
    %765 = vmatprep.subr.mxu0 0.0
    %766 = vmatpush1.msra.mxu0 0.0
    %767 = vmatprep.subr.mxu0 0.0
    %768 = vmatpush1.msra.mxu0 0.0
    %769 = vmatprep.subr.mxu0 0.0
    %770 = vmatpush1.msra.mxu0 0.0
    %771 = vmatprep.subr.mxu0 0.0
    %772 = vmatpush1.msra.mxu0 0.0
    %773 = vmatprep.subr.mxu0 0.0
    %774 = vmatpush1.msra.mxu0 0.0
    %775 = vmatprep.mubr.f32.mxu0 0.0
    %776 = vmatmul.mubr.f32.gmra.mrb[0].mxu0 %v560
    %v777 = vpop.f32.mrb[0].mxu0
    %v778 = vadd.f32 %v693, %v777
    %v779 = vpop.f32.mrb[0].mxu0
    %780 = vmatprep.mubr.f32.mxu0 0.0
    %781 = vmatmul.mubr.f32.gmra.mrb[0].mxu0 %v565
    %v782 = vpop.f32.mrb[0].mxu0
    %v783 = vadd.f32 %v698, %v782
    %v784 = vpop.f32.mrb[0].mxu0
    %785 = vmatprep.mubr.f32.mxu0 0.0
    %786 = vmatmul.mubr.f32.gmra.mrb[0].mxu0 %v570
    %v787 = vpop.f32.mrb[0].mxu0
    %v788 = vadd.f32 %v703, %v787
    %v789 = vpop.f32.mrb[0].mxu0
    %790 = vmatprep.mubr.f32.mxu0 0.0
    %791 = vmatmul.mubr.f32.gmra.mrb[0].mxu0 %v575
    %v792 = vpop.f32.mrb[0].mxu0
    %v793 = vadd.f32 %v708, %v792
    %v794 = vpop.f32.mrb[0].mxu0
    %795 = vdwg.mxu0
    %v796 = vadd.f32 %v61, %v778
    %v797 = vadd.f32 %v62, %v783
    %v798 = vadd.f32 %v63, %v788
    %v799 = vadd.f32 %v64, %v793
    %v800 = vld [vmem:[%s8] sm:$0x1]
    %v802 = vlaneseq
    %v803 = vshrl.u32 %v802, 7
    %v804 = vsub.s32 0, %v803
    %v805 = vrot.slane %v800, %v804
    %v807 = vadd.f32 %v796, %v805
    %v808 = vadd.f32 %v797, %v805
    %v809 = vadd.f32 %v798, %v805
    %v810 = vadd.f32 %v799, %v805
    %811 = vst [vmem:[#allocation7] sm:$0xff] %v807
    %812 = vst [vmem:[#allocation7 + $0x8] sm:$0xff] %v808
    %813 = vst [vmem:[#allocation7 + $0x10] sm:$0xff] %v809
    %814 = vst [vmem:[#allocation7 + $0x18] sm:$0xff] %v810
    // Predicated region
    $region46: #{tpu_custom_call.1} parent=1 // pred_check
      _
    $region47: #{tpu_custom_call.1} parent=1 // pred_check_branch
      %816 = sbr.rel (0) target = $region49
    $region48: #{tpu_custom_call.1} parent=1 // pred_region
      %s818 = ssub.s32 512, 512
      %819 = vsyncadd [#allocation4], %s818
      %s820 = sshll.u32 [#allocation7], 4
      %s821 = int_to_ptr.vmem [resolvable:$true] %s820
      %826 = dma.vmem_to_hbm [thread:$0]  %s821, 512, %s9, [#allocation4], 128, 128, 8
    $region49: #{tpu_custom_call.1} parent=1 // pred_fallthru
      _
    // Predicated region
    $region50: #{tpu_custom_call.1} parent=1 // pred_check
      _
    $region51: #{tpu_custom_call.1} parent=1 // pred_check_branch
      %828 = sbr.rel (0) target = $region53
    $region52: #{tpu_custom_call.1} parent=1 // pred_region
      %829 = dma.done [#allocation4], 512
    $region53: #{tpu_custom_call.1} parent=1 // pred_fallthru
      _
    %830 = vsyncpa [#allocation3], 1
    %831 = vsyncpa [#allocation6], 1
    %832 = vsyncpa [#allocation4], 1

</llo_original>
